<compile_context>
chip_gen: v7x
topology: tpu7x:2x2x1
jax: 0.10.0
libtpu: 0.0.40
codegen_flags: <defaults>
</compile_context>

<pallas_src>
import functools
import math

import jax
import jax.numpy as jnp
from jax.experimental import pallas as pl
from jax.experimental.pallas import tpu as pltpu


def _round_up(x, m):
    return ((x + m - 1) // m) * m


def _sage_layer_kernel(a_ref, xsrc_ref, xdst_ref, ws_ref, wn_ref, b_ref,
                       o_ref, neigh_acc, *, apply_relu):
    """out_tile = X_dst @ Ws + (sum_k A[i, k] @ X[k]) @ Wn + b   [+ relu]."""
    k = pl.program_id(1)

    @pl.when(k == 0)
    def _init():
        neigh_acc[...] = jnp.zeros_like(neigh_acc)

    # O(N^2) neighbor aggregation: bf16 MXU matmul, f32 accumulation in VMEM scratch.
    neigh_acc[...] += jnp.dot(a_ref[...], xsrc_ref[...],
                              preferred_element_type=jnp.float32)

    @pl.when(k == pl.num_programs(1) - 1)
    def _finalize():
        # k-invariant epilogue: self transform, neighbor projection, bias, ReLU —
        # issued once per output tile (not once per k step).
        self_term = jnp.dot(xdst_ref[...].astype(jnp.float32), ws_ref[...],
                            preferred_element_type=jnp.float32)
        neigh_term = jnp.dot(neigh_acc[...], wn_ref[...],
                             preferred_element_type=jnp.float32)
        out = self_term + neigh_term + b_ref[...]
        if apply_relu:
            out = jnp.maximum(out, 0.0)
        o_ref[...] = out.astype(o_ref.dtype)


def _sage_layer(adj_bf16, x_bf16, ws_pad, wn_pad, b_pad, *, apply_relu,
                out_dtype, tm, tk):
    """adj_bf16: [Np, Np] bf16; x_bf16: [Np, Fp] bf16; ws/wn: [Fp, Fp] f32; b: [1, Fp]."""
    n_pad = adj_bf16.shape[0]
    f_pad = ws_pad.shape[1]
    grid = (n_pad // tm, n_pad // tk)  # (dst tiles: parallel, src tiles: reduction)
    kernel = functools.partial(_sage_layer_kernel, apply_relu=apply_relu)
    return pl.pallas_call(
        kernel,
        out_shape=jax.ShapeDtypeStruct((n_pad, f_pad), out_dtype),
        grid_spec=pltpu.PrefetchScalarGridSpec(
            num_scalar_prefetch=0,
            grid=grid,
            in_specs=[
                pl.BlockSpec((tm, tk), lambda i, k: (i, k)),        # A tile
                pl.BlockSpec((tk, f_pad), lambda i, k: (k, 0)),     # X src tile
                pl.BlockSpec((tm, f_pad), lambda i, k: (i, 0)),     # X dst tile
                pl.BlockSpec((f_pad, f_pad), lambda i, k: (0, 0)),  # W_self (padded)
                pl.BlockSpec((f_pad, f_pad), lambda i, k: (0, 0)),  # W_neigh (padded)
                pl.BlockSpec((1, f_pad), lambda i, k: (0, 0)),      # bias (padded)
            ],
            out_specs=pl.BlockSpec((tm, f_pad), lambda i, k: (i, 0)),
            scratch_shapes=[pltpu.VMEM((tm, f_pad), jnp.float32)],  # neigh accumulator
        ),
        compiler_params=pltpu.CompilerParams(
            dimension_semantics=("parallel", "arbitrary")),
    )(adj_bf16, x_bf16, x_bf16, ws_pad, wn_pad, b_pad)


def sage_full(adj_norm, x, params, *, tm=128, tk=128):
    """adj_norm: [N, N] row-normalized adjacency (f32); x: [N, in_feats] (f32).

    Tile sizes: 128 works on every generation (v5e MXU shape); on v6e sweep tm/tk
    up to 256-512, on v7x keep ~256 and leave VMEM headroom (64 MiB total).
    """
    n, in_feats = x.shape
    hid_feats = params["w_self1"].shape[1]
    out_feats = params["w_self2"].shape[1]

    f_pad = _round_up(max(in_feats, hid_feats, out_feats, 128), 128)
    n_pad = _round_up(n, math.lcm(tm, tk))

    # bf16 for the big MXU operands (adjacency + node features); f32 weights/bias.
    # Zero padding of A rows/cols and feature rows/cols leaves the mean aggregation
    # unchanged (A_norm is normalized over the real neighbors only).
    a_p = jnp.zeros((n_pad, n_pad), jnp.bfloat16).at[:n, :n].set(
        adj_norm.astype(jnp.bfloat16))
    x_p = jnp.zeros((n_pad, f_pad), jnp.bfloat16).at[:n, :in_feats].set(
        x.astype(jnp.bfloat16))

    def pad_w(w):  # [f_in, f_out] -> [f_pad, f_pad] (zero rows/cols)
        return jnp.zeros((f_pad, f_pad), jnp.float32).at[
            :w.shape[0], :w.shape[1]].set(w.astype(jnp.float32))

    def pad_b(b):  # -> [1, f_pad]
        b = b.reshape(1, -1).astype(jnp.float32)
        return jnp.zeros((1, f_pad), jnp.float32).at[:, :b.shape[1]].set(b)

    # TODO(synk): the two layers could be fused into a single pallas_call with h
    # resident in VMEM; kept as two tiled calls here (h is written back once in bf16).
    h_p = _sage_layer(a_p, x_p,
                      pad_w(params["w_self1"]), pad_w(params["w_neigh1"]),
                      pad_b(params["b1"]),
                      apply_relu=True, out_dtype=jnp.bfloat16, tm=tm, tk=tk)
    o_p = _sage_layer(a_p, h_p,
                      pad_w(params["w_self2"]), pad_w(params["w_neigh2"]),
                      pad_b(params["b2"]),
                      apply_relu=False, out_dtype=jnp.float32, tm=tm, tk=tk)
    return o_p[:n, :out_feats]


def _ref_sage_full(adj_norm, x, params):
    """Pure-JAX reference with the same bf16 quantization points as the kernel."""
    q = lambda v: v.astype(jnp.bfloat16).astype(jnp.float32)
    with jax.default_matmul_precision("float32"):
        a = q(adj_norm)
        h = q(x)
        h = h @ params["w_self1"] + (a @ h) @ params["w_neigh1"] + params["b1"]
        h = q(jnp.maximum(h, 0.0))
        out = h @ params["w_self2"] + (a @ h) @ params["w_neigh2"] + params["b2"]
    return out


if __name__ == "__main__":
    # Small synthetic problem (N deliberately not a multiple of the tile size to
    # exercise the padding path; padded rows/cols are sliced off the result).
    N = 200
    IN_FEATS = 8
    HID_FEATS = 32
    OUT_FEATS = 16

    key = jax.random.PRNGKey(0)
    k_adj, k_x, k1, k2, k3, k4, k5, k6 = jax.random.split(key, 8)

    # Deterministic random graph -> row-normalized dense adjacency (mean aggregator).
    adj = jax.random.bernoulli(k_adj, p=0.1, shape=(N, N)).astype(jnp.float32)
    deg = jnp.sum(adj, axis=1, keepdims=True)
    adj_norm = jnp.where(deg > 0, adj / jnp.maximum(deg, 1.0), 0.0)

    x = jax.random.normal(k_x, (N, IN_FEATS), dtype=jnp.float32)

    def linear_init(k, fan_in, fan_out):
        scale = 1.0 / jnp.sqrt(jnp.float32(fan_in))
        return jax.random.uniform(k, (fan_in, fan_out), jnp.float32, -scale, scale)

    params = {
        "w_self1": linear_init(k1, IN_FEATS, HID_FEATS),
        "w_neigh1": linear_init(k2, IN_FEATS, HID_FEATS),
        "b1": 0.1 * jax.random.normal(k5, (1, HID_FEATS), dtype=jnp.float32),
        "w_self2": linear_init(k3, HID_FEATS, OUT_FEATS),
        "w_neigh2": linear_init(k4, HID_FEATS, OUT_FEATS),
        "b2": 0.1 * jax.random.normal(k6, (1, OUT_FEATS), dtype=jnp.float32),
    }

    out = jax.block_until_ready(sage_full(adj_norm, x, params))
    ref = _ref_sage_full(adj_norm, x, params)
    assert out.shape == (N, OUT_FEATS)
    max_err = float(jnp.max(jnp.abs(out - ref)))
    assert jnp.allclose(out, ref, atol=1e-2, rtol=1e-2), f"max abs err {max_err}"
    print("KERNEL_OK")
</pallas_src>

<mosaic_0001>
module attributes {stable_mosaic.version = 11 : i64} {
  func.func @_sage_layer_kernel(%arg0: i32, %arg1: i32, %arg2: memref<128x128xbf16, #tpu.memory_space<vmem>>, %arg3: memref<128x128xbf16, #tpu.memory_space<vmem>>, %arg4: memref<128x128xbf16, #tpu.memory_space<vmem>>, %arg5: memref<128x128xf32, #tpu.memory_space<vmem>>, %arg6: memref<128x128xf32, #tpu.memory_space<vmem>>, %arg7: memref<1x128xf32, #tpu.memory_space<vmem>>, %arg8: memref<128x128xbf16, #tpu.memory_space<vmem>>, %arg9: memref<128x128xf32, #tpu.memory_space<vmem>>) attributes {dimension_semantics = [#tpu.dimension_semantics<parallel>, #tpu.dimension_semantics<arbitrary>], iteration_bounds = array<i64: 2, 2>, scalar_prefetch = 0 : i64, scratch_operands = 1 : i64, tpu.core_type = #tpu.core_type<tc>, window_params = [{transform_indices = @transform_0, window_bounds = array<i64: 128, 128>}, {transform_indices = @transform_1, window_bounds = array<i64: 128, 128>}, {transform_indices = @transform_2, window_bounds = array<i64: 128, 128>}, {pipeline_mode = #tpu.pipeline_mode<synchronous>, transform_indices = @transform_3, window_bounds = array<i64: 128, 128>}, {pipeline_mode = #tpu.pipeline_mode<synchronous>, transform_indices = @transform_4, window_bounds = array<i64: 128, 128>}, {pipeline_mode = #tpu.pipeline_mode<synchronous>, transform_indices = @transform_5, window_bounds = array<i64: 1, 128>}, {transform_indices = @transform_6, window_bounds = array<i64: 128, 128>}]} {
    %c0_i32 = arith.constant 0 : i32
    %0 = arith.cmpi eq, %arg1, %c0_i32 : i32
    %1 = arith.extui %0 : i1 to i32
    %c0_i32_0 = arith.constant 0 : i32
    %2 = arith.cmpi ne, %1, %c0_i32_0 : i32
    scf.if %2 {
      %cst_9 = arith.constant 0.000000e+00 : f32
      %12 = vector.broadcast %cst_9 : f32 to vector<128x128xf32>
      %c0_10 = arith.constant 0 : index
      %c0_11 = arith.constant 0 : index
      %13 = vector.load %arg9[%c0_10, %c0_11] : memref<128x128xf32, #tpu.memory_space<vmem>>, vector<128x128xf32>
      tpu.vector_store %arg9[%c0_10, %c0_11], %12 {strides = array<i32>} : memref<128x128xf32, #tpu.memory_space<vmem>>, vector<128x128xf32>,
    } else {
    }
    %c0 = arith.constant 0 : index
    %c0_1 = arith.constant 0 : index
    %3 = vector.load %arg9[%c0, %c0_1] : memref<128x128xf32, #tpu.memory_space<vmem>>, vector<128x128xf32>
    %c0_2 = arith.constant 0 : index
    %c0_3 = arith.constant 0 : index
    %4 = vector.load %arg2[%c0_2, %c0_3] : memref<128x128xbf16, #tpu.memory_space<vmem>>, vector<128x128xbf16>
    %c0_4 = arith.constant 0 : index
    %c0_5 = arith.constant 0 : index
    %5 = vector.load %arg3[%c0_4, %c0_5] : memref<128x128xbf16, #tpu.memory_space<vmem>>, vector<128x128xbf16>
    %cst = arith.constant dense<0.000000e+00> : vector<128x128xf32>
    %6 = tpu.matmul %4, %5, %cst {dimension_numbers = #tpu.dot_dimension_numbers<[1], [0], [0], [1], [0, 0, 1, 1], [], []>} : vector<128x128xbf16>, vector<128x128xbf16>, vector<128x128xf32> -> vector<128x128xf32>
    %7 = arith.addf %3, %6 : vector<128x128xf32>
    %c0_6 = arith.constant 0 : index
    %c0_7 = arith.constant 0 : index
    %8 = vector.load %arg9[%c0_6, %c0_7] : memref<128x128xf32, #tpu.memory_space<vmem>>, vector<128x128xf32>
    tpu.vector_store %arg9[%c0_6, %c0_7], %7 {strides = array<i32>} : memref<128x128xf32, #tpu.memory_space<vmem>>, vector<128x128xf32>,
    %c1_i32 = arith.constant 1 : i32
    %9 = arith.cmpi eq, %arg1, %c1_i32 : i32
    %10 = arith.extui %9 : i1 to i32
    %c0_i32_8 = arith.constant 0 : i32
    %11 = arith.cmpi ne, %10, %c0_i32_8 : i32
    scf.if %11 {
      %c0_9 = arith.constant 0 : index
      %c0_10 = arith.constant 0 : index
      %12 = vector.load %arg4[%c0_9, %c0_10] : memref<128x128xbf16, #tpu.memory_space<vmem>>, vector<128x128xbf16>
      %13 = arith.extf %12 : vector<128x128xbf16> to vector<128x128xf32>
      %c0_11 = arith.constant 0 : index
      %c0_12 = arith.constant 0 : index
      %14 = vector.load %arg5[%c0_11, %c0_12] : memref<128x128xf32, #tpu.memory_space<vmem>>, vector<128x128xf32>
      %cst_13 = arith.constant dense<0.000000e+00> : vector<128x128xf32>
      %15 = tpu.matmul %13, %14, %cst_13 {dimension_numbers = #tpu.dot_dimension_numbers<[1], [0], [0], [1], [0, 0, 1, 1], [], []>} : vector<128x128xf32>, vector<128x128xf32>, vector<128x128xf32> -> vector<128x128xf32>
      %c0_14 = arith.constant 0 : index
      %c0_15 = arith.constant 0 : index
      %16 = vector.load %arg9[%c0_14, %c0_15] : memref<128x128xf32, #tpu.memory_space<vmem>>, vector<128x128xf32>
      %c0_16 = arith.constant 0 : index
      %c0_17 = arith.constant 0 : index
      %17 = vector.load %arg6[%c0_16, %c0_17] : memref<128x128xf32, #tpu.memory_space<vmem>>, vector<128x128xf32>
      %cst_18 = arith.constant dense<0.000000e+00> : vector<128x128xf32>
      %18 = tpu.matmul %16, %17, %cst_18 {dimension_numbers = #tpu.dot_dimension_numbers<[1], [0], [0], [1], [0, 0, 1, 1], [], []>} : vector<128x128xf32>, vector<128x128xf32>, vector<128x128xf32> -> vector<128x128xf32>
      %19 = arith.addf %15, %18 : vector<128x128xf32>
      %c0_19 = arith.constant 0 : index
      %c0_20 = arith.constant 0 : index
      %20 = vector.load %arg7[%c0_19, %c0_20] : memref<1x128xf32, #tpu.memory_space<vmem>>, vector<1x128xf32>
      %21 = vector.broadcast %20 : vector<1x128xf32> to vector<128x128xf32>
      %22 = arith.addf %19, %21 : vector<128x128xf32>
      %cst_21 = arith.constant 0.000000e+00 : f32
      %23 = vector.broadcast %cst_21 : f32 to vector<128x128xf32>
      %24 = arith.maximumf %22, %23 : vector<128x128xf32>
      %25 = arith.truncf %24 : vector<128x128xf32> to vector<128x128xbf16>
      %c0_22 = arith.constant 0 : index
      %c0_23 = arith.constant 0 : index
      %26 = vector.load %arg8[%c0_22, %c0_23] : memref<128x128xbf16, #tpu.memory_space<vmem>>, vector<128x128xbf16>
      tpu.vector_store %arg8[%c0_22, %c0_23], %25 {strides = array<i32>} : memref<128x128xbf16, #tpu.memory_space<vmem>>, vector<128x128xbf16>,
    } else {
    }
    return
  }
  func.func @transform_0(%arg0: i32, %arg1: i32) -> (i32, i32) {
    %c0_i32 = arith.constant 0 : i32
    return %arg0, %arg1 : i32, i32
  }
  func.func @transform_1(%arg0: i32, %arg1: i32) -> (i32, i32) {
    %c0_i32 = arith.constant 0 : i32
    %c0_i32_0 = arith.constant 0 : i32
    return %arg1, %c0_i32 : i32, i32
  }
  func.func @transform_2(%arg0: i32, %arg1: i32) -> (i32, i32) {
    %c0_i32 = arith.constant 0 : i32
    %c0_i32_0 = arith.constant 0 : i32
    return %arg0, %c0_i32 : i32, i32
  }
  func.func @transform_3(%arg0: i32, %arg1: i32) -> (i32, i32) {
    %c0_i32 = arith.constant 0 : i32
    %c0_i32_0 = arith.constant 0 : i32
    %c0_i32_1 = arith.constant 0 : i32
    return %c0_i32, %c0_i32_0 : i32, i32
  }
  func.func @transform_4(%arg0: i32, %arg1: i32) -> (i32, i32) {
    %c0_i32 = arith.constant 0 : i32
    %c0_i32_0 = arith.constant 0 : i32
    %c0_i32_1 = arith.constant 0 : i32
    return %c0_i32, %c0_i32_0 : i32, i32
  }
  func.func @transform_5(%arg0: i32, %arg1: i32) -> (i32, i32) {
    %c0_i32 = arith.constant 0 : i32
    %c0_i32_0 = arith.constant 0 : i32
    %c0_i32_1 = arith.constant 0 : i32
    return %c0_i32, %c0_i32_0 : i32, i32
  }
  func.func @transform_6(%arg0: i32, %arg1: i32) -> (i32, i32) {
    %c0_i32 = arith.constant 0 : i32
    %c0_i32_0 = arith.constant 0 : i32
    return %arg0, %c0_i32 : i32, i32
  }
}

</mosaic_0001>

<llo_original>
// kernel: tpu_custom_call.1
$region0: #{tpu_custom_call.1}
  #allocation0 [shape = 'u32[]', space=smem, size = 0x4, offset = 0x4, fixed_abs, tag = 'smem constant byte address 0x4 - core index']
  #allocation1 [shape = 'u32[144,128]{1,0:T(1,128)}', space=vmem, size = 0x12000, scoped, tag = 'internal scratch']
  #allocation2 [shape = 'f32[128,128]{1,0:T(8,128)}', space=vmem, size = 0x10000, scoped, tag = 'scratch operand']
  %s0 = inlined_call_operand.hbm [shape: bf16[256,256], index: 0, kind: input, shape index: {}]
  %s1 = inlined_call_operand.hbm [shape: bf16[256,128], index: 1, kind: input, shape index: {}]
  %s2 = inlined_call_operand.hbm [shape: bf16[256,128], index: 2, kind: input, shape index: {}]
  %s3 = inlined_call_operand.hbm [shape: f32[128,128], index: 3, kind: input, shape index: {}]
  %s4 = inlined_call_operand.hbm [shape: f32[128,128], index: 4, kind: input, shape index: {}]
  %s5 = inlined_call_operand.vmem [shape: f32[1,128], index: 5, kind: input, shape index: {}]
  %s6 = inlined_call_operand.hbm [shape: bf16[256,128], index: 6, kind: output, shape index: {}]
  %s7 = sld [smem:[#allocation0]]
  $region85: #{tpu_custom_call.1} parent=0
    _
  %s9 = ssub.s32 1, %s7
  %s10 = scalar_select 0, %s9, %s7
  $region1: #{tpu_custom_call.1} parent=0
    #allocation3 [shape = 'u8[65536]{0}', space=vmem, size = 0x10000, scoped, tag = 'input window, operand 0']
    #allocation4 [shape = 's32[2]{0}', space=sflag, size = 0x8, scoped, tag = 'scoped memory for tpu_custom_call.1']
    #allocation5 [shape = 's32[2]{0}', space=sflag, size = 0x8, scoped, tag = 'scoped memory for tpu_custom_call.1']
    #allocation6 [shape = 'u8[65536]{0}', space=vmem, size = 0x10000, scoped, tag = 'input window, operand 1']
    #allocation7 [shape = 's32[2]{0}', space=sflag, size = 0x8, scoped, tag = 'scoped memory for tpu_custom_call.1']
    #allocation8 [shape = 'u8[65536]{0}', space=vmem, size = 0x10000, scoped, tag = 'input window, operand 2']
    #allocation9 [shape = 'u8[65536]{0}', space=vmem, size = 0x10000, scoped, tag = 'input window, operand 3, single buffered']
    #allocation10 [shape = 's32[1]{0}', space=sflag, size = 0x4, scoped, tag = 'scoped memory for tpu_custom_call.1']
    #allocation11 [shape = 'u8[65536]{0}', space=vmem, size = 0x10000, scoped, tag = 'input window, operand 4, single buffered']
    #allocation12 [shape = 'u8[65536]{0}', space=vmem, size = 0x10000, scoped, tag = 'output window, operand 0']
    %11 = vsyncpa [#allocation4], 0
    %s12 = scalar_lea.sflag [#allocation4], 1
    %13 = vsyncpa %s12, 0
    %14 = vsyncpa [#allocation7], 0
    %s15 = scalar_lea.sflag [#allocation7], 1
    %16 = vsyncpa %s15, 0
    %17 = vsyncpa [#allocation10], 0
    %18 = vsyncpa [#allocation5], 0
    %s19 = scalar_lea.sflag [#allocation5], 1
    %20 = vsyncpa %s19, 0
    loop: start=0, step=1, limit=6
    $region2: #{tpu_custom_call.1} parent=1 // loop_pre_header
      _
    $region3: #{tpu_custom_call.1} parent=1 // loop_header
      %s22 = sphi 0, %s26
      %p23 = scmp.ge.s32.totalorder %s22, 6
      %s29 = sphi 0, %s41
      %s30 = sphi 0, %s37
      %s31 = sphi 0, %s29
      %s32 = sphi 0, %s30
      %s33 = sphi 0, %s31
      %s34 = sphi 0, %s32
      %s46 = sphi 0, %s48
      %s49 = sphi 0, %s46
      %s50 = sphi 0, %s49
      %s66 = sphi 0, %s50
      %s72 = sphi 0, %s74
      %s75 = sphi 0, %s72
      %s76 = sphi 0, %s75
      %s92 = sphi 0, %s76
      %s98 = sphi 0, %s100
      %s101 = sphi 0, %s98
      %s102 = sphi 0, %s101
      %s118 = sphi 0, %s102
      %s122 = sphi 0, %s122
      %s124 = sphi 0, %s122
      %s125 = sphi 0, %s124
      %s139 = sphi 0, %s125
      %s143 = sphi 0, %s143
      %s145 = sphi 0, %s143
      %s146 = sphi 0, %s145
      %s160 = sphi 0, %s146
      %s164 = sphi 0, %s164
      %s166 = sphi 0, %s164
      %s167 = sphi 0, %s166
      %s181 = sphi 0, %s167
      %s187 = sphi 0, %s189
      %s190 = sphi 0, %s187
      %s191 = sphi 0, %s190
      %s207 = sphi 0, %s191
    $region4: #{tpu_custom_call.1} parent=1 // loop_header_branch
      %25 = sbr.rel (%p23) target = $region8
    $region5: #{tpu_custom_call.1} parent=1 // loop_body
      %s27 = ssub.s32 %s22, 1
      %s28 = ssub.s32 %s22, 2
      %s35 = sadd.s32 1, %s30
      %p36 = scmp.ge.s32.totalorder %s35, 2
      %s37 = scalar_select %p36, 0, %s35
      %s38 = sadd.s32 1, %s29
      %s39 = scalar_select %p36, %s38, %s29
      %p40 = scmp.ge.s32.totalorder %s39, 2
      %s41 = scalar_select %p40, 0, %s39
      %s42 = ssub.s32 %s29, %s41
      %s43 = ssub.s32 %s30, %s37
      %s44 = sor.u32 %s42, %s43
      %p45 = scmp.eq.s32.totalorder %s44, 0
      %s47 = sadd.s32 %s46, 1
      %s48 = scalar_select %p45, %s46, %s47
      %p51 = pneg %p45
      %p52 = scmp.eq.s32.totalorder %s22, 3
      %p53 = por %p51, %p52
      %p54 = scmp.ne.s32.totalorder %s46, %s49
      %p55 = scmp.eq.s32.totalorder %s22, 0
      %p56 = por %p54, %p55
      %p57 = scmp.ne.s32.totalorder %s46, %s49
      %p58 = scmp.eq.s32.totalorder %s27, 3
      %p59 = por %p57, %p58
      %p60 = scmp.ne.s32.totalorder %s49, %s50
      %p61 = scmp.eq.s32.totalorder %s27, 0
      %p62 = por %p60, %p61
      %p63 = scmp.ne.s32.totalorder %s49, %s50
      %p64 = scmp.eq.s32.totalorder %s28, 3
      %p65 = por %p63, %p64
      %p67 = scmp.ne.s32.totalorder %s50, %s66
      %p68 = scmp.eq.s32.totalorder %s28, 0
      %p69 = por %p67, %p68
      %s70 = ssub.s32 %s30, %s37
      %p71 = scmp.eq.s32.totalorder %s70, 0
      %s73 = sadd.s32 %s72, 1
      %s74 = scalar_select %p71, %s72, %s73
      %p77 = pneg %p71
      %p78 = scmp.eq.s32.totalorder %s22, 3
      %p79 = por %p77, %p78
      %p80 = scmp.ne.s32.totalorder %s72, %s75
      %p81 = scmp.eq.s32.totalorder %s22, 0
      %p82 = por %p80, %p81
      %p83 = scmp.ne.s32.totalorder %s72, %s75
      %p84 = scmp.eq.s32.totalorder %s27, 3
      %p85 = por %p83, %p84
      %p86 = scmp.ne.s32.totalorder %s75, %s76
      %p87 = scmp.eq.s32.totalorder %s27, 0
      %p88 = por %p86, %p87
      %p89 = scmp.ne.s32.totalorder %s75, %s76
      %p90 = scmp.eq.s32.totalorder %s28, 3
      %p91 = por %p89, %p90
      %p93 = scmp.ne.s32.totalorder %s76, %s92
      %p94 = scmp.eq.s32.totalorder %s28, 0
      %p95 = por %p93, %p94
      %s96 = ssub.s32 %s29, %s41
      %p97 = scmp.eq.s32.totalorder %s96, 0
      %s99 = sadd.s32 %s98, 1
      %s100 = scalar_select %p97, %s98, %s99
      %p103 = pneg %p97
      %p104 = scmp.eq.s32.totalorder %s22, 3
      %p105 = por %p103, %p104
      %p106 = scmp.ne.s32.totalorder %s98, %s101
      %p107 = scmp.eq.s32.totalorder %s22, 0
      %p108 = por %p106, %p107
      %p109 = scmp.ne.s32.totalorder %s98, %s101
      %p110 = scmp.eq.s32.totalorder %s27, 3
      %p111 = por %p109, %p110
      %p112 = scmp.ne.s32.totalorder %s101, %s102
      %p113 = scmp.eq.s32.totalorder %s27, 0
      %p114 = por %p112, %p113
      %p115 = scmp.ne.s32.totalorder %s101, %s102
      %p116 = scmp.eq.s32.totalorder %s28, 3
      %p117 = por %p115, %p116
      %p119 = scmp.ne.s32.totalorder %s102, %s118
      %p120 = scmp.eq.s32.totalorder %s28, 0
      %p121 = por %p119, %p120
      %s123 = sadd.s32 %s122, 1
      %p126 = scmp.eq.s32.totalorder %s22, 3
      %p127 = scmp.ne.s32.totalorder %s122, %s124
      %p128 = scmp.eq.s32.totalorder %s22, 0
      %p129 = por %p127, %p128
      %p130 = scmp.ne.s32.totalorder %s122, %s124
      %p131 = scmp.eq.s32.totalorder %s27, 3
      %p132 = por %p130, %p131
      %p133 = scmp.ne.s32.totalorder %s124, %s125
      %p134 = scmp.eq.s32.totalorder %s27, 0
      %p135 = por %p133, %p134
      %p136 = scmp.ne.s32.totalorder %s124, %s125
      %p137 = scmp.eq.s32.totalorder %s28, 3
      %p138 = por %p136, %p137
      %p140 = scmp.ne.s32.totalorder %s125, %s139
      %p141 = scmp.eq.s32.totalorder %s28, 0
      %p142 = por %p140, %p141
      %s144 = sadd.s32 %s143, 1
      %p147 = scmp.eq.s32.totalorder %s22, 3
      %p148 = scmp.ne.s32.totalorder %s143, %s145
      %p149 = scmp.eq.s32.totalorder %s22, 0
      %p150 = por %p148, %p149
      %p151 = scmp.ne.s32.totalorder %s143, %s145
      %p152 = scmp.eq.s32.totalorder %s27, 3
      %p153 = por %p151, %p152
      %p154 = scmp.ne.s32.totalorder %s145, %s146
      %p155 = scmp.eq.s32.totalorder %s27, 0
      %p156 = por %p154, %p155
      %p157 = scmp.ne.s32.totalorder %s145, %s146
      %p158 = scmp.eq.s32.totalorder %s28, 3
      %p159 = por %p157, %p158
      %p161 = scmp.ne.s32.totalorder %s146, %s160
      %p162 = scmp.eq.s32.totalorder %s28, 0
      %p163 = por %p161, %p162
      %s165 = sadd.s32 %s164, 1
      %p168 = scmp.eq.s32.totalorder %s22, 3
      %p169 = scmp.ne.s32.totalorder %s164, %s166
      %p170 = scmp.eq.s32.totalorder %s22, 0
      %p171 = por %p169, %p170
      %p172 = scmp.ne.s32.totalorder %s164, %s166
      %p173 = scmp.eq.s32.totalorder %s27, 3
      %p174 = por %p172, %p173
      %p175 = scmp.ne.s32.totalorder %s166, %s167
      %p176 = scmp.eq.s32.totalorder %s27, 0
      %p177 = por %p175, %p176
      %p178 = scmp.ne.s32.totalorder %s166, %s167
      %p179 = scmp.eq.s32.totalorder %s28, 3
      %p180 = por %p178, %p179
      %p182 = scmp.ne.s32.totalorder %s167, %s181
      %p183 = scmp.eq.s32.totalorder %s28, 0
      %p184 = por %p182, %p183
      %s185 = ssub.s32 %s29, %s41
      %p186 = scmp.eq.s32.totalorder %s185, 0
      %s188 = sadd.s32 %s187, 1
      %s189 = scalar_select %p186, %s187, %s188
      %p192 = pneg %p186
      %p193 = scmp.eq.s32.totalorder %s22, 3
      %p194 = por %p192, %p193
      %p195 = scmp.ne.s32.totalorder %s187, %s190
      %p196 = scmp.eq.s32.totalorder %s22, 0
      %p197 = por %p195, %p196
      %p198 = scmp.ne.s32.totalorder %s187, %s190
      %p199 = scmp.eq.s32.totalorder %s27, 3
      %p200 = por %p198, %p199
      %p201 = scmp.ne.s32.totalorder %s190, %s191
      %p202 = scmp.eq.s32.totalorder %s27, 0
      %p203 = por %p201, %p202
      %p204 = scmp.ne.s32.totalorder %s190, %s191
      %p205 = scmp.eq.s32.totalorder %s28, 3
      %p206 = por %p204, %p205
      %p208 = scmp.ne.s32.totalorder %s191, %s207
      %p209 = scmp.eq.s32.totalorder %s28, 0
      %p210 = por %p208, %p209
      %p211 = scmp.le.s32.totalorder 1, %s22
      %p212 = scmp.lt.s32.totalorder %s22, 5
      %p213 = pnand %p211, %p212
      %p214 = pneg %p213
      // Predicated region
      $region9: #{tpu_custom_call.1} parent=5 // pred_check
        _
      $region10: #{tpu_custom_call.1} parent=5 // pred_check_branch
        %216 = sbr.rel (%p213) target = $region12
      $region11: #{tpu_custom_call.1} parent=5 // pred_region
        %s217 = ssub.s32 %s22, 1
        // Predicated region
        $region13: #{tpu_custom_call.1} parent=11 // pred_check
          %p218 = pneg %p135
        $region14: #{tpu_custom_call.1} parent=11 // pred_check_branch
          %220 = sbr.rel (%p218) target = $region16
        $region15: #{tpu_custom_call.1} parent=11 // pred_region
          %s222 = ssub.s32 2048, 2048
          %223 = vsyncadd [#allocation10], %s222
          %s224 = sshll.u32 [#allocation9], 4
          %s225 = int_to_ptr.vmem [resolvable:$true] %s224
          %230 = dma.hbm_to_vmem [thread:$0]  %s3, 2048, %s225, [#allocation10], 128, 128, 8
        $region16: #{tpu_custom_call.1} parent=11 // pred_fallthru
          _
        // Predicated region
        $region17: #{tpu_custom_call.1} parent=11 // pred_check
          %p231 = pneg %p156
        $region18: #{tpu_custom_call.1} parent=11 // pred_check_branch
          %233 = sbr.rel (%p231) target = $region20
        $region19: #{tpu_custom_call.1} parent=11 // pred_region
          %s235 = ssub.s32 2048, 2048
          %236 = vsyncadd [#allocation10], %s235
          %s237 = sshll.u32 [#allocation11], 4
          %s238 = int_to_ptr.vmem [resolvable:$true] %s237
          %243 = dma.hbm_to_vmem [thread:$0]  %s4, 2048, %s238, [#allocation10], 128, 128, 8
        $region20: #{tpu_custom_call.1} parent=11 // pred_fallthru
          _
        // Predicated region
        $region21: #{tpu_custom_call.1} parent=11 // pred_check
          %p244 = pneg %p177
        $region22: #{tpu_custom_call.1} parent=11 // pred_check_branch
          %246 = sbr.rel (%p244) target = $region24
        $region23: #{tpu_custom_call.1} parent=11 // pred_region
          _
        $region24: #{tpu_custom_call.1} parent=11 // pred_fallthru
          _
      $region12: #{tpu_custom_call.1} parent=5 // pred_fallthru
        _
      %p247 = scmp.lt.s32.totalorder %s22, 4
      // Predicated region
      $region25: #{tpu_custom_call.1} parent=5 // pred_check
        %p248 = pneg %p247
      $region26: #{tpu_custom_call.1} parent=5 // pred_check_branch
        %250 = sbr.rel (%p248) target = $region28
      $region27: #{tpu_custom_call.1} parent=5 // pred_region
        // Predicated region
        $region29: #{tpu_custom_call.1} parent=27 // pred_check
          %p251 = pneg %p56
        $region30: #{tpu_custom_call.1} parent=27 // pred_check_branch
          %253 = sbr.rel (%p251) target = $region32
        $region31: #{tpu_custom_call.1} parent=27 // pred_region
          %s254 = sand.u32 %s46, 1
          %s255 = scalar_lea.sflag [#allocation4], %s254
          %s256 = sand.u32 %s46, 1
          %s257 = smul.addr %s256, 64
          %s258 = scalar_lea.vmem [#allocation3], %s257
          %s259 = smul.u32 16, %s29
          %s261 = ssub.s32 1024, 1024
          %262 = vsyncadd %s255, %s261
          %s263 = smul.addr %s259, 2
          %s264 = sadd.s32 %s30, %s263
          %s265 = smul.addr %s264, 64
          %s266 = scalar_lea.hbm %s0, %s265
          %s267 = sshll.u32 %s258, 4
          %s268 = int_to_ptr.vmem [resolvable:$true] %s267
          %273 = dma.hbm_to_vmem [thread:$0]  %s266, 1024, %s268, %s255, 128, 64, 4
        $region32: #{tpu_custom_call.1} parent=27 // pred_fallthru
          _
        // Predicated region
        $region33: #{tpu_custom_call.1} parent=27 // pred_check
          %p274 = pneg %p82
        $region34: #{tpu_custom_call.1} parent=27 // pred_check_branch
          %276 = sbr.rel (%p274) target = $region36
        $region35: #{tpu_custom_call.1} parent=27 // pred_region
          %s277 = sand.u32 %s22, 1
          %s278 = scalar_lea.sflag [#allocation7], %s277
          %s279 = sand.u32 %s72, 1
          %s280 = smul.addr %s279, 64
          %s281 = scalar_lea.vmem [#allocation6], %s280
          %s282 = smul.u32 16, %s30
          %s284 = ssub.s32 1024, 1024
          %285 = vsyncadd %s278, %s284
          %s286 = smul.addr %s282, 64
          %s287 = scalar_lea.hbm %s1, %s286
          %s288 = sshll.u32 %s281, 4
          %s289 = int_to_ptr.vmem [resolvable:$true] %s288
          %294 = dma.hbm_to_vmem [thread:$0]  %s287, 1024, %s289, %s278, 64, 64, 4
        $region36: #{tpu_custom_call.1} parent=27 // pred_fallthru
          _
        // Predicated region
        $region37: #{tpu_custom_call.1} parent=27 // pred_check
          %p295 = pneg %p108
        $region38: #{tpu_custom_call.1} parent=27 // pred_check_branch
          %297 = sbr.rel (%p295) target = $region40
        $region39: #{tpu_custom_call.1} parent=27 // pred_region
          %s298 = sand.u32 %s22, 1
          %s299 = scalar_lea.sflag [#allocation7], %s298
          %s300 = sand.u32 %s98, 1
          %s301 = smul.addr %s300, 64
          %s302 = scalar_lea.vmem [#allocation8], %s301
          %s303 = smul.u32 16, %s29
          %s305 = ssub.s32 1024, 1024
          %306 = vsyncadd %s299, %s305
          %s307 = smul.addr %s303, 64
          %s308 = scalar_lea.hbm %s2, %s307
          %s309 = sshll.u32 %s302, 4
          %s310 = int_to_ptr.vmem [resolvable:$true] %s309
          %315 = dma.hbm_to_vmem [thread:$0]  %s308, 1024, %s310, %s299, 64, 64, 4
        $region40: #{tpu_custom_call.1} parent=27 // pred_fallthru
          _
      $region28: #{tpu_custom_call.1} parent=5 // pred_fallthru
        _
      %p316 = scmp.le.s32.totalorder 1, %s22
      %p317 = scmp.lt.s32.totalorder %s22, 5
      %p318 = pnand %p316, %p317
      %p319 = pneg %p318
      // Predicated region
      $region41: #{tpu_custom_call.1} parent=5 // pred_check
        _
      $region42: #{tpu_custom_call.1} parent=5 // pred_check_branch
        %321 = sbr.rel (%p318) target = $region44
      $region43: #{tpu_custom_call.1} parent=5 // pred_region
        %s322 = ssub.s32 %s22, 1
        %s323 = sand.u32 %s49, 1
        %s324 = scalar_lea.sflag [#allocation4], %s323
        %s325 = sand.u32 %s49, 1
        %s326 = smul.addr %s325, 64
        %s327 = scalar_lea.vmem [#allocation3], %s326
        // Predicated region
        $region45: #{tpu_custom_call.1} parent=43 // pred_check
          %p328 = pneg %p62
        $region46: #{tpu_custom_call.1} parent=43 // pred_check_branch
          %330 = sbr.rel (%p328) target = $region48
        $region47: #{tpu_custom_call.1} parent=43 // pred_region
          %331 = dma.done %s324, 1024
        $region48: #{tpu_custom_call.1} parent=43 // pred_fallthru
          _
        %s332 = sand.u32 %s27, 1
        %s333 = scalar_lea.sflag [#allocation7], %s332
        %s334 = sand.u32 %s75, 1
        %s335 = smul.addr %s334, 64
        %s336 = scalar_lea.vmem [#allocation6], %s335
        // Predicated region
        $region49: #{tpu_custom_call.1} parent=43 // pred_check
          %p337 = pneg %p88
        $region50: #{tpu_custom_call.1} parent=43 // pred_check_branch
          %339 = sbr.rel (%p337) target = $region52
        $region51: #{tpu_custom_call.1} parent=43 // pred_region
          %340 = dma.done %s333, 1024
        $region52: #{tpu_custom_call.1} parent=43 // pred_fallthru
          _
        %s341 = sand.u32 %s27, 1
        %s342 = scalar_lea.sflag [#allocation7], %s341
        %s343 = sand.u32 %s101, 1
        %s344 = smul.addr %s343, 64
        %s345 = scalar_lea.vmem [#allocation8], %s344
        // Predicated region
        $region53: #{tpu_custom_call.1} parent=43 // pred_check
          %p346 = pneg %p114
        $region54: #{tpu_custom_call.1} parent=43 // pred_check_branch
          %348 = sbr.rel (%p346) target = $region56
        $region55: #{tpu_custom_call.1} parent=43 // pred_region
          %349 = dma.done %s342, 1024
        $region56: #{tpu_custom_call.1} parent=43 // pred_fallthru
          _
        // Predicated region
        $region57: #{tpu_custom_call.1} parent=43 // pred_check
          %p350 = pneg %p135
        $region58: #{tpu_custom_call.1} parent=43 // pred_check_branch
          %352 = sbr.rel (%p350) target = $region60
        $region59: #{tpu_custom_call.1} parent=43 // pred_region
          %353 = dma.done [#allocation10], 2048
        $region60: #{tpu_custom_call.1} parent=43 // pred_fallthru
          _
        // Predicated region
        $region61: #{tpu_custom_call.1} parent=43 // pred_check
          %p354 = pneg %p156
        $region62: #{tpu_custom_call.1} parent=43 // pred_check_branch
          %356 = sbr.rel (%p354) target = $region64
        $region63: #{tpu_custom_call.1} parent=43 // pred_region
          %357 = dma.done [#allocation10], 2048
        $region64: #{tpu_custom_call.1} parent=43 // pred_fallthru
          _
        %s358 = sand.u32 %s49, 1
        %s359 = scalar_lea.sflag [#allocation4], %s358
        %s360 = sand.u32 %s49, 1
        %s361 = smul.addr %s360, 64
        %s362 = scalar_lea.vmem [#allocation3], %s361
        %p363 = pneg %p62
        %p364 = pneg %p59
        %s365 = sand.u32 %s27, 1
        %s366 = scalar_lea.sflag [#allocation7], %s365
        %s367 = sand.u32 %s75, 1
        %s368 = smul.addr %s367, 64
        %s369 = scalar_lea.vmem [#allocation6], %s368
        %p370 = pneg %p88
        %p371 = pneg %p85
        %s372 = sand.u32 %s27, 1
        %s373 = scalar_lea.sflag [#allocation7], %s372
        %s374 = sand.u32 %s101, 1
        %s375 = smul.addr %s374, 64
        %s376 = scalar_lea.vmem [#allocation8], %s375
        %p377 = pneg %p114
        %p378 = pneg %p111
        %p379 = pneg %p135
        %p380 = pneg %p132
        %p381 = pneg %p156
        %p382 = pneg %p153
        %p383 = pneg %p177
        %p384 = pneg %p174
        %p385 = pneg %p203
        %p386 = pneg %p200
        %s387 = sand.u32 %s190, 1
        %s388 = scalar_lea.sflag [#allocation5], %s387
        %s389 = sand.u32 %s190, 1
        %s390 = smul.addr %s389, 64
        %s391 = scalar_lea.vmem [#allocation12], %s390
        %s392 = smul.u32 16, %s31
        %s393 = smul.u32 16, %s32
        %s394 = smul.u32 16, %s31
        %s395 = smul.u32 16, %s31
        %p397 = scmp.eq.s32.totalorder %s32, 0
        // Predicated region
        $region65: #{tpu_custom_call.1} parent=43 // pred_check
          %p398 = pneg %p397
        $region66: #{tpu_custom_call.1} parent=43 // pred_check_branch
          %400 = sbr.rel (%p398) target = $region68
        $region67: #{tpu_custom_call.1} parent=43 // pred_region
          %401 = vst [vmem:[#allocation2] sm:$0xff] 0.0
          %402 = vst [vmem:[#allocation2 + $0x8] sm:$0xff] 0.0
          %403 = vst [vmem:[#allocation2 + $0x10] sm:$0xff] 0.0
          %404 = vst [vmem:[#allocation2 + $0x18] sm:$0xff] 0.0
          %405 = vst [vmem:[#allocation2 + $0x20] sm:$0xff] 0.0
          %406 = vst [vmem:[#allocation2 + $0x28] sm:$0xff] 0.0
          %407 = vst [vmem:[#allocation2 + $0x30] sm:$0xff] 0.0
          %408 = vst [vmem:[#allocation2 + $0x38] sm:$0xff] 0.0
          %409 = vst [vmem:[#allocation2 + $0x40] sm:$0xff] 0.0
          %410 = vst [vmem:[#allocation2 + $0x48] sm:$0xff] 0.0
          %411 = vst [vmem:[#allocation2 + $0x50] sm:$0xff] 0.0
          %412 = vst [vmem:[#allocation2 + $0x58] sm:$0xff] 0.0
          %413 = vst [vmem:[#allocation2 + $0x60] sm:$0xff] 0.0
          %414 = vst [vmem:[#allocation2 + $0x68] sm:$0xff] 0.0
          %415 = vst [vmem:[#allocation2 + $0x70] sm:$0xff] 0.0
          %416 = vst [vmem:[#allocation2 + $0x78] sm:$0xff] 0.0
        $region68: #{tpu_custom_call.1} parent=43 // pred_fallthru
          _
        %v417 = vld [vmem:[#allocation2] sm:$0xff]
        %v418 = vld [vmem:[#allocation2 + $0x8] sm:$0xff]
        %v419 = vld [vmem:[#allocation2 + $0x10] sm:$0xff]
        %v420 = vld [vmem:[#allocation2 + $0x18] sm:$0xff]
        %v421 = vld [vmem:[#allocation2 + $0x20] sm:$0xff]
        %v422 = vld [vmem:[#allocation2 + $0x28] sm:$0xff]
        %v423 = vld [vmem:[#allocation2 + $0x30] sm:$0xff]
        %v424 = vld [vmem:[#allocation2 + $0x38] sm:$0xff]
        %v425 = vld [vmem:[#allocation2 + $0x40] sm:$0xff]
        %v426 = vld [vmem:[#allocation2 + $0x48] sm:$0xff]
        %v427 = vld [vmem:[#allocation2 + $0x50] sm:$0xff]
        %v428 = vld [vmem:[#allocation2 + $0x58] sm:$0xff]
        %v429 = vld [vmem:[#allocation2 + $0x60] sm:$0xff]
        %v430 = vld [vmem:[#allocation2 + $0x68] sm:$0xff]
        %v431 = vld [vmem:[#allocation2 + $0x70] sm:$0xff]
        %v432 = vld [vmem:[#allocation2 + $0x78] sm:$0xff]
        %v433 = vld [vmem:[%s327] sm:$0xf]
        %v434 = vld [vmem:[%s327 + $0x4] sm:$0xf]
        %v435 = vld [vmem:[%s327 + $0x8] sm:$0xf]
        %v436 = vld [vmem:[%s327 + $0xc] sm:$0xf]
        %v437 = vld [vmem:[%s327 + $0x10] sm:$0xf]
        %v438 = vld [vmem:[%s327 + $0x14] sm:$0xf]
        %v439 = vld [vmem:[%s327 + $0x18] sm:$0xf]
        %v440 = vld [vmem:[%s327 + $0x1c] sm:$0xf]
        %v441 = vld [vmem:[%s327 + $0x20] sm:$0xf]
        %v442 = vld [vmem:[%s327 + $0x24] sm:$0xf]
        %v443 = vld [vmem:[%s327 + $0x28] sm:$0xf]
        %v444 = vld [vmem:[%s327 + $0x2c] sm:$0xf]
        %v445 = vld [vmem:[%s327 + $0x30] sm:$0xf]
        %v446 = vld [vmem:[%s327 + $0x34] sm:$0xf]
        %v447 = vld [vmem:[%s327 + $0x38] sm:$0xf]
        %v448 = vld [vmem:[%s327 + $0x3c] sm:$0xf]
        %v449 = vld [vmem:[%s336] sm:$0xf]
        %v450 = vld [vmem:[%s336 + $0x4] sm:$0xf]
        %v451 = vld [vmem:[%s336 + $0x8] sm:$0xf]
        %v452 = vld [vmem:[%s336 + $0xc] sm:$0xf]
        %v453 = vld [vmem:[%s336 + $0x10] sm:$0xf]
        %v454 = vld [vmem:[%s336 + $0x14] sm:$0xf]
        %v455 = vld [vmem:[%s336 + $0x18] sm:$0xf]
        %v456 = vld [vmem:[%s336 + $0x1c] sm:$0xf]
        %v457 = vld [vmem:[%s336 + $0x20] sm:$0xf]
        %v458 = vld [vmem:[%s336 + $0x24] sm:$0xf]
        %v459 = vld [vmem:[%s336 + $0x28] sm:$0xf]
        %v460 = vld [vmem:[%s336 + $0x2c] sm:$0xf]
        %v461 = vld [vmem:[%s336 + $0x30] sm:$0xf]
        %v462 = vld [vmem:[%s336 + $0x34] sm:$0xf]
        %v463 = vld [vmem:[%s336 + $0x38] sm:$0xf]
        %v464 = vld [vmem:[%s336 + $0x3c] sm:$0xf]
        %v481 = vunpack.c.l.b16 %v433
        %v482 = vunpack.c.l.b16 %v434
        %v483 = vunpack.c.l.b16 %v435
        %v484 = vunpack.c.l.b16 %v436
        %v485 = vunpack.c.l.b16 %v437
        %v486 = vunpack.c.l.b16 %v438
        %v487 = vunpack.c.l.b16 %v439
        %v488 = vunpack.c.l.b16 %v440
        %v489 = vunpack.c.l.b16 %v441
        %v490 = vunpack.c.l.b16 %v442
        %v491 = vunpack.c.l.b16 %v443
        %v492 = vunpack.c.l.b16 %v444
        %v493 = vunpack.c.l.b16 %v445
        %v494 = vunpack.c.l.b16 %v446
        %v495 = vunpack.c.l.b16 %v447
        %v496 = vunpack.c.l.b16 %v448
        %v497 = vpack.c.b16 %v482, %v481
        %v498 = vpack.c.b16 %v484, %v483
        %v499 = vpack.c.b16 %v486, %v485
        %v500 = vpack.c.b16 %v488, %v487
        %v501 = vpack.c.b16 %v490, %v489
        %v502 = vpack.c.b16 %v492, %v491
        %v503 = vpack.c.b16 %v494, %v493
        %v504 = vpack.c.b16 %v496, %v495
        %v529 = vunpack.c.l.b16 %v449
        %v530 = vunpack.c.l.b16 %v450
        %v531 = vunpack.c.l.b16 %v451
        %v532 = vunpack.c.l.b16 %v452
        %v533 = vunpack.c.l.b16 %v453
        %v534 = vunpack.c.l.b16 %v454
        %v535 = vunpack.c.l.b16 %v455
        %v536 = vunpack.c.l.b16 %v456
        %v537 = vunpack.c.l.b16 %v457
        %v538 = vunpack.c.l.b16 %v458
        %v539 = vunpack.c.l.b16 %v459
        %v540 = vunpack.c.l.b16 %v460
        %v541 = vunpack.c.l.b16 %v461
        %v542 = vunpack.c.l.b16 %v462
        %v543 = vunpack.c.l.b16 %v463
        %v544 = vunpack.c.l.b16 %v464
        %v545 = vpack.c.b16 %v530, %v529
        %v546 = vpack.c.b16 %v532, %v531
        %v547 = vpack.c.b16 %v534, %v533
        %v548 = vpack.c.b16 %v536, %v535
        %v549 = vpack.c.b16 %v538, %v537
        %v550 = vpack.c.b16 %v540, %v539
        %v551 = vpack.c.b16 %v542, %v541
        %v552 = vpack.c.b16 %v544, %v543
        %561 = vmatprep.subr.bf16.mxu0 0
        %562 = vmatpush1.bf16.msra.mxu0 %v545
        %563 = vmatprep.subr.bf16.mxu0 0
        %564 = vmatpush1.bf16.msra.mxu0 %v546
        %565 = vmatprep.subr.bf16.mxu0 0
        %566 = vmatpush1.bf16.msra.mxu0 %v547
        %567 = vmatprep.subr.bf16.mxu0 0
        %568 = vmatpush1.bf16.msra.mxu0 %v548
        %569 = vmatprep.subr.bf16.mxu0 0
        %570 = vmatpush1.bf16.msra.mxu0 %v549
        %571 = vmatprep.subr.bf16.mxu0 0
        %572 = vmatpush1.bf16.msra.mxu0 %v550
        %573 = vmatprep.subr.bf16.mxu0 0
        %574 = vmatpush1.bf16.msra.mxu0 %v551
        %575 = vmatprep.subr.bf16.mxu0 0
        %576 = vmatpush1.bf16.msra.mxu0 %v552
        %577 = vmatprep.subr.bf16.mxu0 0
        %578 = vmatpush1.bf16.msra.mxu0 0
        %579 = vmatprep.subr.bf16.mxu0 0
        %580 = vmatpush1.bf16.msra.mxu0 0
        %581 = vmatprep.subr.bf16.mxu0 0
        %582 = vmatpush1.bf16.msra.mxu0 0
        %583 = vmatprep.subr.bf16.mxu0 0
        %584 = vmatpush1.bf16.msra.mxu0 0
        %585 = vmatprep.subr.bf16.mxu0 0
        %586 = vmatpush1.bf16.msra.mxu0 0
        %587 = vmatprep.subr.bf16.mxu0 0
        %588 = vmatpush1.bf16.msra.mxu0 0
        %589 = vmatprep.subr.bf16.mxu0 0
        %590 = vmatpush1.bf16.msra.mxu0 0
        %591 = vmatprep.subr.bf16.mxu0 0
        %592 = vmatpush1.bf16.msra.mxu0 0
        %593 = vmatprep.mubr.bf16.mxu0 0
        %594 = vmatmul.mubr.bf16.gmra.mrb[0].mxu0 %v497
        %v595 = vpop.f32.mrb[0].mxu0
        %v596 = vadd.f32 0.0, %v595
        %v597 = vpop.f32.mrb[0].mxu0
        %v598 = vpop.f32.mrb[0].mxu0
        %v599 = vadd.f32 0.0, %v598
        %v600 = vpop.f32.mrb[0].mxu0
        %601 = vmatprep.mubr.bf16.mxu0 0
        %602 = vmatmul.mubr.bf16.gmra.mrb[0].mxu0 %v498
        %v603 = vpop.f32.mrb[0].mxu0
        %v604 = vadd.f32 0.0, %v603
        %v605 = vpop.f32.mrb[0].mxu0
        %v606 = vpop.f32.mrb[0].mxu0
        %v607 = vadd.f32 0.0, %v606
        %v608 = vpop.f32.mrb[0].mxu0
        %609 = vmatprep.mubr.bf16.mxu0 0
        %610 = vmatmul.mubr.bf16.gmra.mrb[0].mxu0 %v499
        %v611 = vpop.f32.mrb[0].mxu0
        %v612 = vadd.f32 0.0, %v611
        %v613 = vpop.f32.mrb[0].mxu0
        %v614 = vpop.f32.mrb[0].mxu0
        %v615 = vadd.f32 0.0, %v614
        %v616 = vpop.f32.mrb[0].mxu0
        %617 = vmatprep.mubr.bf16.mxu0 0
        %618 = vmatmul.mubr.bf16.gmra.mrb[0].mxu0 %v500
        %v619 = vpop.f32.mrb[0].mxu0
        %v620 = vadd.f32 0.0, %v619
        %v621 = vpop.f32.mrb[0].mxu0
        %v622 = vpop.f32.mrb[0].mxu0
        %v623 = vadd.f32 0.0, %v622
        %v624 = vpop.f32.mrb[0].mxu0
        %625 = vmatprep.mubr.bf16.mxu0 0
        %626 = vmatmul.mubr.bf16.gmra.mrb[0].mxu0 %v501
        %v627 = vpop.f32.mrb[0].mxu0
        %v628 = vadd.f32 0.0, %v627
        %v629 = vpop.f32.mrb[0].mxu0
        %v630 = vpop.f32.mrb[0].mxu0
        %v631 = vadd.f32 0.0, %v630
        %v632 = vpop.f32.mrb[0].mxu0
        %633 = vmatprep.mubr.bf16.mxu0 0
        %634 = vmatmul.mubr.bf16.gmra.mrb[0].mxu0 %v502
        %v635 = vpop.f32.mrb[0].mxu0
        %v636 = vadd.f32 0.0, %v635
        %v637 = vpop.f32.mrb[0].mxu0
        %v638 = vpop.f32.mrb[0].mxu0
        %v639 = vadd.f32 0.0, %v638
        %v640 = vpop.f32.mrb[0].mxu0
        %641 = vmatprep.mubr.bf16.mxu0 0
        %642 = vmatmul.mubr.bf16.gmra.mrb[0].mxu0 %v503
        %v643 = vpop.f32.mrb[0].mxu0
        %v644 = vadd.f32 0.0, %v643
        %v645 = vpop.f32.mrb[0].mxu0
        %v646 = vpop.f32.mrb[0].mxu0
        %v647 = vadd.f32 0.0, %v646
        %v648 = vpop.f32.mrb[0].mxu0
        %649 = vmatprep.mubr.bf16.mxu0 0
        %650 = vmatmul.mubr.bf16.gmra.mrb[0].mxu0 %v504
        %v651 = vpop.f32.mrb[0].mxu0
        %v652 = vadd.f32 0.0, %v651
        %v653 = vpop.f32.mrb[0].mxu0
        %v654 = vpop.f32.mrb[0].mxu0
        %v655 = vadd.f32 0.0, %v654
        %v656 = vpop.f32.mrb[0].mxu0
        %657 = vdwg.mxu0
        %v658 = vadd.f32 %v417, %v596
        %v659 = vadd.f32 %v418, %v599
        %v660 = vadd.f32 %v419, %v604
        %v661 = vadd.f32 %v420, %v607
        %v662 = vadd.f32 %v421, %v612
        %v663 = vadd.f32 %v422, %v615
        %v664 = vadd.f32 %v423, %v620
        %v665 = vadd.f32 %v424, %v623
        %v666 = vadd.f32 %v425, %v628
        %v667 = vadd.f32 %v426, %v631
        %v668 = vadd.f32 %v427, %v636
        %v669 = vadd.f32 %v428, %v639
        %v670 = vadd.f32 %v429, %v644
        %v671 = vadd.f32 %v430, %v647
        %v672 = vadd.f32 %v431, %v652
        %v673 = vadd.f32 %v432, %v655
        %674 = vst [vmem:[#allocation2] sm:$0xff] %v658
        %675 = vst [vmem:[#allocation2 + $0x8] sm:$0xff] %v659
        %676 = vst [vmem:[#allocation2 + $0x10] sm:$0xff] %v660
        %677 = vst [vmem:[#allocation2 + $0x18] sm:$0xff] %v661
        %678 = vst [vmem:[#allocation2 + $0x20] sm:$0xff] %v662
        %679 = vst [vmem:[#allocation2 + $0x28] sm:$0xff] %v663
        %680 = vst [vmem:[#allocation2 + $0x30] sm:$0xff] %v664
        %681 = vst [vmem:[#allocation2 + $0x38] sm:$0xff] %v665
        %682 = vst [vmem:[#allocation2 + $0x40] sm:$0xff] %v666
        %683 = vst [vmem:[#allocation2 + $0x48] sm:$0xff] %v667
        %684 = vst [vmem:[#allocation2 + $0x50] sm:$0xff] %v668
        %685 = vst [vmem:[#allocation2 + $0x58] sm:$0xff] %v669
        %686 = vst [vmem:[#allocation2 + $0x60] sm:$0xff] %v670
        %687 = vst [vmem:[#allocation2 + $0x68] sm:$0xff] %v671
        %688 = vst [vmem:[#allocation2 + $0x70] sm:$0xff] %v672
        %689 = vst [vmem:[#allocation2 + $0x78] sm:$0xff] %v673
        %p690 = scmp.eq.s32.totalorder %s32, 1
        // Predicated region
        $region69: #{tpu_custom_call.1} parent=43 // pred_check
          %p691 = pneg %p690
        $region70: #{tpu_custom_call.1} parent=43 // pred_check_branch
          %693 = sbr.rel (%p691) target = $region72
        $region71: #{tpu_custom_call.1} parent=43 // pred_region
          %v694 = vld [vmem:[%s345] sm:$0xf]
          %v695 = vld [vmem:[%s345 + $0x4] sm:$0xf]
          %v696 = vld [vmem:[%s345 + $0x8] sm:$0xf]
          %v697 = vld [vmem:[%s345 + $0xc] sm:$0xf]
          %v698 = vld [vmem:[%s345 + $0x10] sm:$0xf]
          %v699 = vld [vmem:[%s345 + $0x14] sm:$0xf]
          %v700 = vld [vmem:[%s345 + $0x18] sm:$0xf]
          %v701 = vld [vmem:[%s345 + $0x1c] sm:$0xf]
          %v702 = vld [vmem:[%s345 + $0x20] sm:$0xf]
          %v703 = vld [vmem:[%s345 + $0x24] sm:$0xf]
          %v704 = vld [vmem:[%s345 + $0x28] sm:$0xf]
          %v705 = vld [vmem:[%s345 + $0x2c] sm:$0xf]
          %v706 = vld [vmem:[%s345 + $0x30] sm:$0xf]
          %v707 = vld [vmem:[%s345 + $0x34] sm:$0xf]
          %v708 = vld [vmem:[%s345 + $0x38] sm:$0xf]
          %v709 = vld [vmem:[%s345 + $0x3c] sm:$0xf]
          %v710 = vunpack.c.l.bf16 %v694
          %v711 = vunpack.c.l.bf16 %v695
          %v712 = vunpack.c.l.bf16 %v696
          %v713 = vunpack.c.l.bf16 %v697
          %v714 = vunpack.c.l.bf16 %v698
          %v715 = vunpack.c.l.bf16 %v699
          %v716 = vunpack.c.l.bf16 %v700
          %v717 = vunpack.c.l.bf16 %v701
          %v718 = vunpack.c.l.bf16 %v702
          %v719 = vunpack.c.l.bf16 %v703
          %v720 = vunpack.c.l.bf16 %v704
          %v721 = vunpack.c.l.bf16 %v705
          %v722 = vunpack.c.l.bf16 %v706
          %v723 = vunpack.c.l.bf16 %v707
          %v724 = vunpack.c.l.bf16 %v708
          %v725 = vunpack.c.l.bf16 %v709
          %v726 = vld [vmem:[#allocation9] sm:$0xff]
          %v727 = vld [vmem:[#allocation9 + $0x8] sm:$0xff]
          %v728 = vld [vmem:[#allocation9 + $0x10] sm:$0xff]
          %v729 = vld [vmem:[#allocation9 + $0x18] sm:$0xff]
          %v730 = vld [vmem:[#allocation9 + $0x20] sm:$0xff]
          %v731 = vld [vmem:[#allocation9 + $0x28] sm:$0xff]
          %v732 = vld [vmem:[#allocation9 + $0x30] sm:$0xff]
          %v733 = vld [vmem:[#allocation9 + $0x38] sm:$0xff]
          %v734 = vld [vmem:[#allocation9 + $0x40] sm:$0xff]
          %v735 = vld [vmem:[#allocation9 + $0x48] sm:$0xff]
          %v736 = vld [vmem:[#allocation9 + $0x50] sm:$0xff]
          %v737 = vld [vmem:[#allocation9 + $0x58] sm:$0xff]
          %v738 = vld [vmem:[#allocation9 + $0x60] sm:$0xff]
          %v739 = vld [vmem:[#allocation9 + $0x68] sm:$0xff]
          %v740 = vld [vmem:[#allocation9 + $0x70] sm:$0xff]
          %v741 = vld [vmem:[#allocation9 + $0x78] sm:$0xff]
          %v742 = vld [vmem:[#allocation2] sm:$0xff]
          %v743 = vld [vmem:[#allocation2 + $0x8] sm:$0xff]
          %v744 = vld [vmem:[#allocation2 + $0x10] sm:$0xff]
          %v745 = vld [vmem:[#allocation2 + $0x18] sm:$0xff]
          %v746 = vld [vmem:[#allocation2 + $0x20] sm:$0xff]
          %v747 = vld [vmem:[#allocation2 + $0x28] sm:$0xff]
          %v748 = vld [vmem:[#allocation2 + $0x30] sm:$0xff]
          %v749 = vld [vmem:[#allocation2 + $0x38] sm:$0xff]
          %v750 = vld [vmem:[#allocation2 + $0x40] sm:$0xff]
          %v751 = vld [vmem:[#allocation2 + $0x48] sm:$0xff]
          %v752 = vld [vmem:[#allocation2 + $0x50] sm:$0xff]
          %v753 = vld [vmem:[#allocation2 + $0x58] sm:$0xff]
          %v754 = vld [vmem:[#allocation2 + $0x60] sm:$0xff]
          %v755 = vld [vmem:[#allocation2 + $0x68] sm:$0xff]
          %v756 = vld [vmem:[#allocation2 + $0x70] sm:$0xff]
          %v757 = vld [vmem:[#allocation2 + $0x78] sm:$0xff]
          %v758 = vld [vmem:[#allocation11] sm:$0xff]
          %v759 = vld [vmem:[#allocation11 + $0x8] sm:$0xff]
          %v760 = vld [vmem:[#allocation11 + $0x10] sm:$0xff]
          %v761 = vld [vmem:[#allocation11 + $0x18] sm:$0xff]
          %v762 = vld [vmem:[#allocation11 + $0x20] sm:$0xff]
          %v763 = vld [vmem:[#allocation11 + $0x28] sm:$0xff]
          %v764 = vld [vmem:[#allocation11 + $0x30] sm:$0xff]
          %v765 = vld [vmem:[#allocation11 + $0x38] sm:$0xff]
          %v766 = vld [vmem:[#allocation11 + $0x40] sm:$0xff]
          %v767 = vld [vmem:[#allocation11 + $0x48] sm:$0xff]
          %v768 = vld [vmem:[#allocation11 + $0x50] sm:$0xff]
          %v769 = vld [vmem:[#allocation11 + $0x58] sm:$0xff]
          %v770 = vld [vmem:[#allocation11 + $0x60] sm:$0xff]
          %v771 = vld [vmem:[#allocation11 + $0x68] sm:$0xff]
          %v772 = vld [vmem:[#allocation11 + $0x70] sm:$0xff]
          %v773 = vld [vmem:[#allocation11 + $0x78] sm:$0xff]
          %774 = vmatprep.subr.mxu0 0.0
          %775 = vmatpush1.msra.mxu0 %v758
          %776 = vmatprep.subr.mxu0 0.0
          %777 = vmatpush1.msra.mxu0 %v759
          %778 = vmatprep.subr.mxu0 0.0
          %779 = vmatpush1.msra.mxu0 %v760
          %780 = vmatprep.subr.mxu0 0.0
          %781 = vmatpush1.msra.mxu0 %v761
          %782 = vmatprep.subr.mxu0 0.0
          %783 = vmatpush1.msra.mxu0 %v762
          %784 = vmatprep.subr.mxu0 0.0
          %785 = vmatpush1.msra.mxu0 %v763
          %786 = vmatprep.subr.mxu0 0.0
          %787 = vmatpush1.msra.mxu0 %v764
          %788 = vmatprep.subr.mxu0 0.0
          %789 = vmatpush1.msra.mxu0 %v765
          %790 = vmatprep.subr.mxu0 0.0
          %791 = vmatpush1.msra.mxu0 %v766
          %792 = vmatprep.subr.mxu0 0.0
          %793 = vmatpush1.msra.mxu0 %v767
          %794 = vmatprep.subr.mxu0 0.0
          %795 = vmatpush1.msra.mxu0 %v768
          %796 = vmatprep.subr.mxu0 0.0
          %797 = vmatpush1.msra.mxu0 %v769
          %798 = vmatprep.subr.mxu0 0.0
          %799 = vmatpush1.msra.mxu0 %v770
          %800 = vmatprep.subr.mxu0 0.0
          %801 = vmatpush1.msra.mxu0 %v771
          %802 = vmatprep.subr.mxu0 0.0
          %803 = vmatpush1.msra.mxu0 %v772
          %804 = vmatprep.subr.mxu0 0.0
          %805 = vmatpush1.msra.mxu0 %v773
          %806 = vmatprep.subr.mxu0 0.0
          %807 = vmatpush1.msra.mxu0 0.0
          %808 = vmatprep.subr.mxu0 0.0
          %809 = vmatpush1.msra.mxu0 0.0
          %810 = vmatprep.subr.mxu0 0.0
          %811 = vmatpush1.msra.mxu0 0.0
          %812 = vmatprep.subr.mxu0 0.0
          %813 = vmatpush1.msra.mxu0 0.0
          %814 = vmatprep.subr.mxu0 0.0
          %815 = vmatpush1.msra.mxu0 0.0
          %816 = vmatprep.subr.mxu0 0.0
          %817 = vmatpush1.msra.mxu0 0.0
          %818 = vmatprep.subr.mxu0 0.0
          %819 = vmatpush1.msra.mxu0 0.0
          %820 = vmatprep.subr.mxu0 0.0
          %821 = vmatpush1.msra.mxu0 0.0
          %822 = vmatprep.subr.mxu0 0.0
          %823 = vmatpush1.msra.mxu0 0.0
          %824 = vmatprep.subr.mxu0 0.0
          %825 = vmatpush1.msra.mxu0 0.0
          %826 = vmatprep.subr.mxu0 0.0
          %827 = vmatpush1.msra.mxu0 0.0
          %828 = vmatprep.subr.mxu0 0.0
          %829 = vmatpush1.msra.mxu0 0.0
          %830 = vmatprep.subr.mxu0 0.0
          %831 = vmatpush1.msra.mxu0 0.0
          %832 = vmatprep.subr.mxu0 0.0
          %833 = vmatpush1.msra.mxu0 0.0
          %834 = vmatprep.subr.mxu0 0.0
          %835 = vmatpush1.msra.mxu0 0.0
          %836 = vmatprep.subr.mxu0 0.0
          %837 = vmatpush1.msra.mxu0 0.0
          %838 = vmatprep.mubr.f32.mxu0 0.0
          %839 = vmatmul.mubr.f32.gmra.mrb[0].mxu0 %v742
          %v840 = vpop.f32.mrb[0].mxu0
          %v841 = vadd.f32 0.0, %v840
          %v842 = vpop.f32.mrb[0].mxu0
          %843 = vmatprep.mubr.f32.mxu0 0.0
          %844 = vmatmul.mubr.f32.gmra.mrb[0].mxu0 %v743
          %v845 = vpop.f32.mrb[0].mxu0
          %v846 = vadd.f32 0.0, %v845
          %v847 = vpop.f32.mrb[0].mxu0
          %848 = vmatprep.mubr.f32.mxu0 0.0
          %849 = vmatmul.mubr.f32.gmra.mrb[0].mxu0 %v744
          %v850 = vpop.f32.mrb[0].mxu0
          %v851 = vadd.f32 0.0, %v850
          %v852 = vpop.f32.mrb[0].mxu0
          %853 = vmatprep.mubr.f32.mxu0 0.0
          %854 = vmatmul.mubr.f32.gmra.mrb[0].mxu0 %v745
          %v855 = vpop.f32.mrb[0].mxu0
          %v856 = vadd.f32 0.0, %v855
          %v857 = vpop.f32.mrb[0].mxu0
          %858 = vmatprep.mubr.f32.mxu0 0.0
          %859 = vmatmul.mubr.f32.gmra.mrb[0].mxu0 %v746
          %v860 = vpop.f32.mrb[0].mxu0
          %v861 = vadd.f32 0.0, %v860
          %v862 = vpop.f32.mrb[0].mxu0
          %863 = vmatprep.mubr.f32.mxu0 0.0
          %864 = vmatmul.mubr.f32.gmra.mrb[0].mxu0 %v747
          %v865 = vpop.f32.mrb[0].mxu0
          %v866 = vadd.f32 0.0, %v865
          %v867 = vpop.f32.mrb[0].mxu0
          %868 = vmatprep.mubr.f32.mxu0 0.0
          %869 = vmatmul.mubr.f32.gmra.mrb[0].mxu0 %v748
          %v870 = vpop.f32.mrb[0].mxu0
          %v871 = vadd.f32 0.0, %v870
          %v872 = vpop.f32.mrb[0].mxu0
          %873 = vmatprep.mubr.f32.mxu0 0.0
          %874 = vmatmul.mubr.f32.gmra.mrb[0].mxu0 %v749
          %v875 = vpop.f32.mrb[0].mxu0
          %v876 = vadd.f32 0.0, %v875
          %v877 = vpop.f32.mrb[0].mxu0
          %878 = vmatprep.mubr.f32.mxu0 0.0
          %879 = vmatmul.mubr.f32.gmra.mrb[0].mxu0 %v750
          %v880 = vpop.f32.mrb[0].mxu0
          %v881 = vadd.f32 0.0, %v880
          %v882 = vpop.f32.mrb[0].mxu0
          %883 = vmatprep.mubr.f32.mxu0 0.0
          %884 = vmatmul.mubr.f32.gmra.mrb[0].mxu0 %v751
          %v885 = vpop.f32.mrb[0].mxu0
          %v886 = vadd.f32 0.0, %v885
          %v887 = vpop.f32.mrb[0].mxu0
          %888 = vmatprep.mubr.f32.mxu0 0.0
          %889 = vmatmul.mubr.f32.gmra.mrb[0].mxu0 %v752
          %v890 = vpop.f32.mrb[0].mxu0
          %v891 = vadd.f32 0.0, %v890
          %v892 = vpop.f32.mrb[0].mxu0
          %893 = vmatprep.mubr.f32.mxu0 0.0
          %894 = vmatmul.mubr.f32.gmra.mrb[0].mxu0 %v753
          %v895 = vpop.f32.mrb[0].mxu0
          %v896 = vadd.f32 0.0, %v895
          %v897 = vpop.f32.mrb[0].mxu0
          %898 = vmatprep.mubr.f32.mxu0 0.0
          %899 = vmatmul.mubr.f32.gmra.mrb[0].mxu0 %v754
          %v900 = vpop.f32.mrb[0].mxu0
          %v901 = vadd.f32 0.0, %v900
          %v902 = vpop.f32.mrb[0].mxu0
          %903 = vmatprep.mubr.f32.mxu0 0.0
          %904 = vmatmul.mubr.f32.gmra.mrb[0].mxu0 %v755
          %v905 = vpop.f32.mrb[0].mxu0
          %v906 = vadd.f32 0.0, %v905
          %v907 = vpop.f32.mrb[0].mxu0
          %908 = vmatprep.mubr.f32.mxu0 0.0
          %909 = vmatmul.mubr.f32.gmra.mrb[0].mxu0 %v756
          %v910 = vpop.f32.mrb[0].mxu0
          %v911 = vadd.f32 0.0, %v910
          %v912 = vpop.f32.mrb[0].mxu0
          %913 = vmatprep.mubr.f32.mxu0 0.0
          %914 = vmatmul.mubr.f32.gmra.mrb[0].mxu0 %v757
          %v915 = vpop.f32.mrb[0].mxu0
          %v916 = vadd.f32 0.0, %v915
          %v917 = vpop.f32.mrb[0].mxu0
          %918 = vdwg.mxu0
          %919 = vmatprep.subr.mxu0 0.0
          %920 = vmatpush1.msra.mxu0 %v726
          %921 = vmatprep.subr.mxu0 0.0
          %922 = vmatpush1.msra.mxu0 %v727
          %923 = vmatprep.subr.mxu0 0.0
          %924 = vmatpush1.msra.mxu0 %v728
          %925 = vmatprep.subr.mxu0 0.0
          %926 = vmatpush1.msra.mxu0 %v729
          %927 = vmatprep.subr.mxu0 0.0
          %928 = vmatpush1.msra.mxu0 %v730
          %929 = vmatprep.subr.mxu0 0.0
          %930 = vmatpush1.msra.mxu0 %v731
          %931 = vmatprep.subr.mxu0 0.0
          %932 = vmatpush1.msra.mxu0 %v732
          %933 = vmatprep.subr.mxu0 0.0
          %934 = vmatpush1.msra.mxu0 %v733
          %935 = vmatprep.subr.mxu0 0.0
          %936 = vmatpush1.msra.mxu0 %v734
          %937 = vmatprep.subr.mxu0 0.0
          %938 = vmatpush1.msra.mxu0 %v735
          %939 = vmatprep.subr.mxu0 0.0
          %940 = vmatpush1.msra.mxu0 %v736
          %941 = vmatprep.subr.mxu0 0.0
          %942 = vmatpush1.msra.mxu0 %v737
          %943 = vmatprep.subr.mxu0 0.0
          %944 = vmatpush1.msra.mxu0 %v738
          %945 = vmatprep.subr.mxu0 0.0
          %946 = vmatpush1.msra.mxu0 %v739
          %947 = vmatprep.subr.mxu0 0.0
          %948 = vmatpush1.msra.mxu0 %v740
          %949 = vmatprep.subr.mxu0 0.0
          %950 = vmatpush1.msra.mxu0 %v741
          %951 = vmatprep.subr.mxu0 0.0
          %952 = vmatpush1.msra.mxu0 0.0
          %953 = vmatprep.subr.mxu0 0.0
          %954 = vmatpush1.msra.mxu0 0.0
          %955 = vmatprep.subr.mxu0 0.0
          %956 = vmatpush1.msra.mxu0 0.0
          %957 = vmatprep.subr.mxu0 0.0
          %958 = vmatpush1.msra.mxu0 0.0
          %959 = vmatprep.subr.mxu0 0.0
          %960 = vmatpush1.msra.mxu0 0.0
          %961 = vmatprep.subr.mxu0 0.0
          %962 = vmatpush1.msra.mxu0 0.0
          %963 = vmatprep.subr.mxu0 0.0
          %964 = vmatpush1.msra.mxu0 0.0
          %965 = vmatprep.subr.mxu0 0.0
          %966 = vmatpush1.msra.mxu0 0.0
          %967 = vmatprep.subr.mxu0 0.0
          %968 = vmatpush1.msra.mxu0 0.0
          %969 = vmatprep.subr.mxu0 0.0
          %970 = vmatpush1.msra.mxu0 0.0
          %971 = vmatprep.subr.mxu0 0.0
          %972 = vmatpush1.msra.mxu0 0.0
          %973 = vmatprep.subr.mxu0 0.0
          %974 = vmatpush1.msra.mxu0 0.0
          %975 = vmatprep.subr.mxu0 0.0
          %976 = vmatpush1.msra.mxu0 0.0
          %977 = vmatprep.subr.mxu0 0.0
          %978 = vmatpush1.msra.mxu0 0.0
          %979 = vmatprep.subr.mxu0 0.0
          %980 = vmatpush1.msra.mxu0 0.0
          %981 = vmatprep.subr.mxu0 0.0
          %982 = vmatpush1.msra.mxu0 0.0
          %983 = vmatprep.mubr.f32.mxu0 0.0
          %984 = vmatmul.mubr.f32.gmra.mrb[0].mxu0 %v710
          %v985 = vpop.f32.mrb[0].mxu0
          %v986 = vadd.f32 %v841, %v985
          %v987 = vpop.f32.mrb[0].mxu0
          %988 = vmatprep.mubr.f32.mxu0 0.0
          %989 = vmatmul.mubr.f32.gmra.mrb[0].mxu0 %v711
          %v990 = vpop.f32.mrb[0].mxu0
          %v991 = vadd.f32 %v846, %v990
          %v992 = vpop.f32.mrb[0].mxu0
          %993 = vmatprep.mubr.f32.mxu0 0.0
          %994 = vmatmul.mubr.f32.gmra.mrb[0].mxu0 %v712
          %v995 = vpop.f32.mrb[0].mxu0
          %v996 = vadd.f32 %v851, %v995
          %v997 = vpop.f32.mrb[0].mxu0
          %998 = vmatprep.mubr.f32.mxu0 0.0
          %999 = vmatmul.mubr.f32.gmra.mrb[0].mxu0 %v713
          %v1000 = vpop.f32.mrb[0].mxu0
          %v1001 = vadd.f32 %v856, %v1000
          %v1002 = vpop.f32.mrb[0].mxu0
          %1003 = vmatprep.mubr.f32.mxu0 0.0
          %1004 = vmatmul.mubr.f32.gmra.mrb[0].mxu0 %v714
          %v1005 = vpop.f32.mrb[0].mxu0
          %v1006 = vadd.f32 %v861, %v1005
          %v1007 = vpop.f32.mrb[0].mxu0
          %1008 = vmatprep.mubr.f32.mxu0 0.0
          %1009 = vmatmul.mubr.f32.gmra.mrb[0].mxu0 %v715
          %v1010 = vpop.f32.mrb[0].mxu0
          %v1011 = vadd.f32 %v866, %v1010
          %v1012 = vpop.f32.mrb[0].mxu0
          %1013 = vmatprep.mubr.f32.mxu0 0.0
          %1014 = vmatmul.mubr.f32.gmra.mrb[0].mxu0 %v716
          %v1015 = vpop.f32.mrb[0].mxu0
          %v1016 = vadd.f32 %v871, %v1015
          %v1017 = vpop.f32.mrb[0].mxu0
          %1018 = vmatprep.mubr.f32.mxu0 0.0
          %1019 = vmatmul.mubr.f32.gmra.mrb[0].mxu0 %v717
          %v1020 = vpop.f32.mrb[0].mxu0
          %v1021 = vadd.f32 %v876, %v1020
          %v1022 = vpop.f32.mrb[0].mxu0
          %1023 = vmatprep.mubr.f32.mxu0 0.0
          %1024 = vmatmul.mubr.f32.gmra.mrb[0].mxu0 %v718
          %v1025 = vpop.f32.mrb[0].mxu0
          %v1026 = vadd.f32 %v881, %v1025
          %v1027 = vpop.f32.mrb[0].mxu0
          %1028 = vmatprep.mubr.f32.mxu0 0.0
          %1029 = vmatmul.mubr.f32.gmra.mrb[0].mxu0 %v719
          %v1030 = vpop.f32.mrb[0].mxu0
          %v1031 = vadd.f32 %v886, %v1030
          %v1032 = vpop.f32.mrb[0].mxu0
          %1033 = vmatprep.mubr.f32.mxu0 0.0
          %1034 = vmatmul.mubr.f32.gmra.mrb[0].mxu0 %v720
          %v1035 = vpop.f32.mrb[0].mxu0
          %v1036 = vadd.f32 %v891, %v1035
          %v1037 = vpop.f32.mrb[0].mxu0
          %1038 = vmatprep.mubr.f32.mxu0 0.0
          %1039 = vmatmul.mubr.f32.gmra.mrb[0].mxu0 %v721
          %v1040 = vpop.f32.mrb[0].mxu0
          %v1041 = vadd.f32 %v896, %v1040
          %v1042 = vpop.f32.mrb[0].mxu0
          %1043 = vmatprep.mubr.f32.mxu0 0.0
          %1044 = vmatmul.mubr.f32.gmra.mrb[0].mxu0 %v722
          %v1045 = vpop.f32.mrb[0].mxu0
          %v1046 = vadd.f32 %v901, %v1045
          %v1047 = vpop.f32.mrb[0].mxu0
          %1048 = vmatprep.mubr.f32.mxu0 0.0
          %1049 = vmatmul.mubr.f32.gmra.mrb[0].mxu0 %v723
          %v1050 = vpop.f32.mrb[0].mxu0
          %v1051 = vadd.f32 %v906, %v1050
          %v1052 = vpop.f32.mrb[0].mxu0
          %1053 = vmatprep.mubr.f32.mxu0 0.0
          %1054 = vmatmul.mubr.f32.gmra.mrb[0].mxu0 %v724
          %v1055 = vpop.f32.mrb[0].mxu0
          %v1056 = vadd.f32 %v911, %v1055
          %v1057 = vpop.f32.mrb[0].mxu0
          %1058 = vmatprep.mubr.f32.mxu0 0.0
          %1059 = vmatmul.mubr.f32.gmra.mrb[0].mxu0 %v725
          %v1060 = vpop.f32.mrb[0].mxu0
          %v1061 = vadd.f32 %v916, %v1060
          %v1062 = vpop.f32.mrb[0].mxu0
          %1063 = vdwg.mxu0
          %v1064 = vld [vmem:[%s5] sm:$0x1]
          %v1066 = vlaneseq
          %v1067 = vshrl.u32 %v1066, 7
          %v1068 = vsub.s32 0, %v1067
          %v1069 = vrot.slane %v1064, %v1068
          %v1071 = vadd.f32 %v986, %v1069
          %v1072 = vadd.f32 %v991, %v1069
          %v1073 = vadd.f32 %v996, %v1069
          %v1074 = vadd.f32 %v1001, %v1069
          %v1075 = vadd.f32 %v1006, %v1069
          %v1076 = vadd.f32 %v1011, %v1069
          %v1077 = vadd.f32 %v1016, %v1069
          %v1078 = vadd.f32 %v1021, %v1069
          %v1079 = vadd.f32 %v1026, %v1069
          %v1080 = vadd.f32 %v1031, %v1069
          %v1081 = vadd.f32 %v1036, %v1069
          %v1082 = vadd.f32 %v1041, %v1069
          %v1083 = vadd.f32 %v1046, %v1069
          %v1084 = vadd.f32 %v1051, %v1069
          %v1085 = vadd.f32 %v1056, %v1069
          %v1086 = vadd.f32 %v1061, %v1069
          %v1087 = vmax.f32 %v1071, 0.0
          %v1088 = vmax.f32 %v1072, 0.0
          %v1089 = vmax.f32 %v1073, 0.0
          %v1090 = vmax.f32 %v1074, 0.0
          %v1091 = vmax.f32 %v1075, 0.0
          %v1092 = vmax.f32 %v1076, 0.0
          %v1093 = vmax.f32 %v1077, 0.0
          %v1094 = vmax.f32 %v1078, 0.0
          %v1095 = vmax.f32 %v1079, 0.0
          %v1096 = vmax.f32 %v1080, 0.0
          %v1097 = vmax.f32 %v1081, 0.0
          %v1098 = vmax.f32 %v1082, 0.0
          %v1099 = vmax.f32 %v1083, 0.0
          %v1100 = vmax.f32 %v1084, 0.0
          %v1101 = vmax.f32 %v1085, 0.0
          %v1102 = vmax.f32 %v1086, 0.0
          %v1103 = vpack.c.bf16 %v1088, %v1087
          %v1104 = vpack.c.bf16 %v1090, %v1089
          %v1105 = vpack.c.bf16 %v1092, %v1091
          %v1106 = vpack.c.bf16 %v1094, %v1093
          %v1107 = vpack.c.bf16 %v1096, %v1095
          %v1108 = vpack.c.bf16 %v1098, %v1097
          %v1109 = vpack.c.bf16 %v1100, %v1099
          %v1110 = vpack.c.bf16 %v1102, %v1101
          %v1119 = vunpack.c.l.b16 %v1103
          %v1120 = vunpack.c.h.b16 %v1103
          %v1121 = vunpack.c.l.b16 %v1104
          %v1122 = vunpack.c.h.b16 %v1104
          %v1123 = vunpack.c.l.b16 %v1105
          %v1124 = vunpack.c.h.b16 %v1105
          %v1125 = vunpack.c.l.b16 %v1106
          %v1126 = vunpack.c.h.b16 %v1106
          %v1127 = vunpack.c.l.b16 %v1107
          %v1128 = vunpack.c.h.b16 %v1107
          %v1129 = vunpack.c.l.b16 %v1108
          %v1130 = vunpack.c.h.b16 %v1108
          %v1131 = vunpack.c.l.b16 %v1109
          %v1132 = vunpack.c.h.b16 %v1109
          %v1133 = vunpack.c.l.b16 %v1110
          %v1134 = vunpack.c.h.b16 %v1110
          %v1135 = vpack.c.b16 %v1119, %v1119
          %v1136 = vpack.c.b16 %v1120, %v1120
          %v1137 = vpack.c.b16 %v1121, %v1121
          %v1138 = vpack.c.b16 %v1122, %v1122
          %v1139 = vpack.c.b16 %v1123, %v1123
          %v1140 = vpack.c.b16 %v1124, %v1124
          %v1141 = vpack.c.b16 %v1125, %v1125
          %v1142 = vpack.c.b16 %v1126, %v1126
          %v1143 = vpack.c.b16 %v1127, %v1127
          %v1144 = vpack.c.b16 %v1128, %v1128
          %v1145 = vpack.c.b16 %v1129, %v1129
          %v1146 = vpack.c.b16 %v1130, %v1130
          %v1147 = vpack.c.b16 %v1131, %v1131
          %v1148 = vpack.c.b16 %v1132, %v1132
          %v1149 = vpack.c.b16 %v1133, %v1133
          %v1150 = vpack.c.b16 %v1134, %v1134
          %1167 = vst [vmem:[%s391] sm:$0xf] %v1135
          %1168 = vst [vmem:[%s391 + $0x4] sm:$0xf] %v1136
          %1169 = vst [vmem:[%s391 + $0x8] sm:$0xf] %v1137
          %1170 = vst [vmem:[%s391 + $0xc] sm:$0xf] %v1138
          %1171 = vst [vmem:[%s391 + $0x10] sm:$0xf] %v1139
          %1172 = vst [vmem:[%s391 + $0x14] sm:$0xf] %v1140
          %1173 = vst [vmem:[%s391 + $0x18] sm:$0xf] %v1141
          %1174 = vst [vmem:[%s391 + $0x1c] sm:$0xf] %v1142
          %1175 = vst [vmem:[%s391 + $0x20] sm:$0xf] %v1143
          %1176 = vst [vmem:[%s391 + $0x24] sm:$0xf] %v1144
          %1177 = vst [vmem:[%s391 + $0x28] sm:$0xf] %v1145
          %1178 = vst [vmem:[%s391 + $0x2c] sm:$0xf] %v1146
          %1179 = vst [vmem:[%s391 + $0x30] sm:$0xf] %v1147
          %1180 = vst [vmem:[%s391 + $0x34] sm:$0xf] %v1148
          %1181 = vst [vmem:[%s391 + $0x38] sm:$0xf] %v1149
          %1182 = vst [vmem:[%s391 + $0x3c] sm:$0xf] %v1150
        $region72: #{tpu_custom_call.1} parent=43 // pred_fallthru
          _
        %s1183 = sand.u32 %s190, 1
        %s1184 = scalar_lea.sflag [#allocation5], %s1183
        %s1185 = sand.u32 %s190, 1
        %s1186 = smul.addr %s1185, 64
        %s1187 = scalar_lea.vmem [#allocation12], %s1186
        // Predicated region
        $region73: #{tpu_custom_call.1} parent=43 // pred_check
          %p1188 = pneg %p200
        $region74: #{tpu_custom_call.1} parent=43 // pred_check_branch
          %1190 = sbr.rel (%p1188) target = $region76
        $region75: #{tpu_custom_call.1} parent=43 // pred_region
          %s1191 = smul.u32 16, %s31
          %s1193 = ssub.s32 1024, 1024
          %1194 = vsyncadd %s1184, %s1193
          %s1195 = smul.addr %s1191, 64
          %s1196 = scalar_lea.hbm %s6, %s1195
          %s1197 = sshll.u32 %s1187, 4
          %s1198 = int_to_ptr.vmem [resolvable:$true] %s1197
          %1203 = dma.vmem_to_hbm [thread:$0]  %s1198, 1024, %s1196, %s1184, 64, 64, 4
        $region76: #{tpu_custom_call.1} parent=43 // pred_fallthru
          _
      $region44: #{tpu_custom_call.1} parent=5 // pred_fallthru
        _
      %p1204 = scmp.le.s32.totalorder 2, %s22
      // Predicated region
      $region77: #{tpu_custom_call.1} parent=5 // pred_check
        %p1205 = pneg %p1204
      $region78: #{tpu_custom_call.1} parent=5 // pred_check_branch
        %1207 = sbr.rel (%p1205) target = $region80
      $region79: #{tpu_custom_call.1} parent=5 // pred_region
        %s1208 = ssub.s32 %s22, 2
        // Predicated region
        $region81: #{tpu_custom_call.1} parent=79 // pred_check
          %p1209 = pneg %p206
        $region82: #{tpu_custom_call.1} parent=79 // pred_check_branch
          %1211 = sbr.rel (%p1209) target = $region84
        $region83: #{tpu_custom_call.1} parent=79 // pred_region
          %s1212 = sand.u32 %s191, 1
          %s1213 = scalar_lea.sflag [#allocation5], %s1212
          %s1214 = sand.u32 %s191, 1
          %s1215 = smul.addr %s1214, 64
          %s1216 = scalar_lea.vmem [#allocation12], %s1215
          %1217 = dma.done %s1213, 1024
        $region84: #{tpu_custom_call.1} parent=79 // pred_fallthru
          _
      $region80: #{tpu_custom_call.1} parent=5 // pred_fallthru
        _
    $region6: #{tpu_custom_call.1} parent=1 // loop_footer
      %s26 = sadd.s32 1, %s22
    $region7: #{tpu_custom_call.1} parent=1 // loop_footer_branch
      %21 = sbr.rel target = $region3
    $region8: #{tpu_custom_call.1} parent=1 // loop_exit
      _
    %1218 = vsyncpa [#allocation4], 1
    %s1219 = scalar_lea.sflag [#allocation4], 1
    %1220 = vsyncpa %s1219, 1
    %1221 = vsyncpa [#allocation7], 1
    %s1222 = scalar_lea.sflag [#allocation7], 1
    %1223 = vsyncpa %s1222, 1
    %1224 = vsyncpa [#allocation10], 1
    %1225 = vsyncpa [#allocation5], 1
    %s1226 = scalar_lea.sflag [#allocation5], 1
    %1227 = vsyncpa %s1226, 1

</llo_original>
